<compile_context>
chip_gen: v6e
topology: v6e:2x2x1
jax: 0.10.0
libtpu: 0.0.40
codegen_flags: <defaults>
</compile_context>

<pallas_src>
import functools
import math

import numpy as np
import jax
import jax.numpy as jnp
from jax.experimental import pallas as pl
from jax.experimental.pallas import tpu as pltpu


def _sinpos_kernel(idx_ref, freq_ref, phase_ref, out_ref):
    # idx_ref  : (bn, k)    f32 -- k flattened positions packed per output row
    # freq_ref : (1, D)     f32 -- div_term repeated per sin/cos slot
    # phase_ref: (1, D)     f32 -- 0 on sin lanes, pi/2 on cos lanes
    # out_ref  : (bn, k*D)  f32 -- lane-dense packed output tile
    idx = idx_ref[...]
    freq = freq_ref[...]
    phase = phase_ref[...]
    k = idx.shape[1]
    # One (bn, D) piece per packed position: broadcast multiply + phase add
    # (VPU), then a single sin (EUP) over the whole lane-dense tile.
    pieces = [idx[:, c:c + 1] * freq + phase for c in range(k)]
    omega = pieces[0] if k == 1 else jnp.concatenate(pieces, axis=-1)
    out_ref[...] = jnp.sin(omega)


@functools.partial(jax.jit, static_argnames=("d_model",))
def sinusoidal_positional_embedding(emb_indices, d_model):
    if d_model % 2 != 0:
        raise ValueError(f"Sinusoidal positional encoding with odd d_model: {d_model}")

    input_shape = emb_indices.shape
    idx_flat = emb_indices.reshape(-1).astype(jnp.float32)
    n = idx_flat.shape[0]

    # Deterministic constants, computed host-side in f64 and rounded once to f32.
    div_indices = np.arange(0, d_model, 2, dtype=np.float64)
    div_term = np.exp(div_indices * (-np.log(10000.0) / d_model))       # (D/2,)
    freq_np = np.repeat(div_term, 2)                                     # (D,) interleaved
    phase_np = np.zeros((d_model,), dtype=np.float64)
    phase_np[1::2] = np.pi / 2.0                                         # cos(x) = sin(x + pi/2)
    freq = jnp.asarray(freq_np.reshape(1, d_model), dtype=jnp.float32)
    phase = jnp.asarray(phase_np.reshape(1, d_model), dtype=jnp.float32)

    # ---- lane-dense packing: k positions per output row -> row width k*D ----
    if d_model >= 128:
        k = 1
    else:
        k = 128 // math.gcd(d_model, 128)     # k*D is a multiple of 128
    width = k * d_model

    rows = int(pl.cdiv(n, k))
    n_pack = rows * k
    if n_pack != n:                            # tiny input-side pad (indices only)
        idx_flat = jnp.pad(idx_flat, (0, n_pack - n))
    idx2 = idx_flat.reshape(rows, k)

    # ---- row-block size: ~2 MiB output tiles, rows multiple of 8 (or full) ----
    target_tile_bytes = 2 * 1024 * 1024
    bn_cap = max(8, (target_tile_bytes // (width * 4)) // 8 * 8)
    if rows <= bn_cap:
        if rows >= 16 and rows % 16 == 0:
            bn = rows // 2                     # 2 grid steps (v7x megacore), no padding
        else:
            bn = rows                          # single block (block dim == full dim is legal)
    else:
        bn = bn_cap
        # Prefer a nearby block size that divides `rows` exactly, so no output
        # padding (and hence no extra full-output slice pass) is needed.
        for cand in range(bn_cap, max(7, bn_cap // 2), -8):
            if rows % cand == 0:
                bn = cand
                break

    rows_pad = int(pl.cdiv(rows, bn)) * bn
    if rows_pad != rows:
        idx2 = jnp.pad(idx2, ((0, rows_pad - rows), (0, 0)))
    grid = rows_pad // bn

    out = pl.pallas_call(
        _sinpos_kernel,
        out_shape=jax.ShapeDtypeStruct((rows_pad, width), jnp.float32),
        grid_spec=pltpu.PrefetchScalarGridSpec(
            num_scalar_prefetch=0,
            grid=(grid,),
            in_specs=[
                pl.BlockSpec((bn, k), lambda i: (i, 0)),
                pl.BlockSpec((1, d_model), lambda i: (0, 0)),
                pl.BlockSpec((1, d_model), lambda i: (0, 0)),
            ],
            out_specs=pl.BlockSpec((bn, width), lambda i: (i, 0)),
        ),
        compiler_params=pltpu.CompilerParams(
            dimension_semantics=("parallel",),
            vmem_limit_bytes=32 * 1024 * 1024,
        ),
    )(idx2, freq, phase)

    out_flat = out.reshape(rows_pad * k, d_model)   # contiguous -> free when unpadded
    if rows_pad * k != n:
        out_flat = out_flat[:n]
    return out_flat.reshape(*input_shape, d_model)


def _reference(emb_indices, d_model):
    # Pure-numpy reference mirroring the PyTorch forward (f64 math).
    idx = np.asarray(emb_indices, dtype=np.float32).reshape(-1, 1, 1).astype(np.float64)
    div_indices = np.arange(0, d_model, 2, dtype=np.float64)
    div_term = np.exp(div_indices * (-np.log(10000.0) / d_model)).reshape(1, -1, 1)
    omegas = idx * div_term
    emb = np.concatenate([np.sin(omegas), np.cos(omegas)], axis=2)
    return emb.reshape(*np.asarray(emb_indices).shape, d_model)


if __name__ == "__main__":
    key = jax.random.PRNGKey(0)

    # f32 kernel vs f64 numpy reference; arguments reach ~100 rad, where one
    # f32 ulp ~ 8e-6 and cos is computed as sin(x + pi/2) in f32.
    RTOL, ATOL = 1e-5, 2e-5

    # Main case: d_model < 128 exercises the lane-dense packing path (k = 4).
    d_model = 32
    emb_indices = jax.random.uniform(key, (2, 4, 16), dtype=jnp.float32) * 100.0
    out = jax.block_until_ready(sinusoidal_positional_embedding(emb_indices, d_model))
    assert out.shape == (2, 4, 16, d_model), out.shape
    np.testing.assert_allclose(np.asarray(out), _reference(np.asarray(emb_indices), d_model),
                               rtol=RTOL, atol=ATOL)

    # Wide case: d_model >= 128 exercises the k = 1 (unpacked) path.
    d_model2 = 256
    emb2 = jax.random.uniform(jax.random.PRNGKey(1), (3, 5), dtype=jnp.float32) * 100.0
    out2 = jax.block_until_ready(sinusoidal_positional_embedding(emb2, d_model2))
    assert out2.shape == (3, 5, d_model2), out2.shape
    np.testing.assert_allclose(np.asarray(out2), _reference(np.asarray(emb2), d_model2),
                               rtol=RTOL, atol=ATOL)

    # Ragged case: N not a multiple of the packing factor (pad + slice path).
    emb3 = jax.random.uniform(jax.random.PRNGKey(2), (7,), dtype=jnp.float32) * 100.0
    out3 = jax.block_until_ready(sinusoidal_positional_embedding(emb3, 32))
    assert out3.shape == (7, 32), out3.shape
    np.testing.assert_allclose(np.asarray(out3), _reference(np.asarray(emb3), 32),
                               rtol=RTOL, atol=ATOL)

    print("KERNEL_OK")
</pallas_src>

<mosaic_0001>
module attributes {stable_mosaic.version = 11 : i64} {
  func.func @_sinpos_kernel(%arg0: i32, %arg1: memref<16x4xf32, #tpu.memory_space<vmem>>, %arg2: memref<1x32xf32, #tpu.memory_space<vmem>>, %arg3: memref<1x32xf32, #tpu.memory_space<vmem>>, %arg4: memref<16x128xf32, #tpu.memory_space<vmem>>) attributes {dimension_semantics = [#tpu.dimension_semantics<parallel>], iteration_bounds = array<i64: 2>, scalar_prefetch = 0 : i64, scratch_operands = 0 : i64, tpu.core_type = #tpu.core_type<tc>, window_params = [{transform_indices = @transform_0, window_bounds = array<i64: 16, 4>}, {pipeline_mode = #tpu.pipeline_mode<synchronous>, transform_indices = @transform_1, window_bounds = array<i64: 1, 32>}, {pipeline_mode = #tpu.pipeline_mode<synchronous>, transform_indices = @transform_2, window_bounds = array<i64: 1, 32>}, {transform_indices = @transform_3, window_bounds = array<i64: 16, 128>}]} {
    %c0 = arith.constant 0 : index
    %c0_0 = arith.constant 0 : index
    %0 = vector.load %arg1[%c0, %c0_0] : memref<16x4xf32, #tpu.memory_space<vmem>>, vector<16x4xf32>
    %c0_1 = arith.constant 0 : index
    %c0_2 = arith.constant 0 : index
    %1 = vector.load %arg2[%c0_1, %c0_2] : memref<1x32xf32, #tpu.memory_space<vmem>>, vector<1x32xf32>
    %c0_3 = arith.constant 0 : index
    %c0_4 = arith.constant 0 : index
    %2 = vector.load %arg3[%c0_3, %c0_4] : memref<1x32xf32, #tpu.memory_space<vmem>>, vector<1x32xf32>
    %3 = vector.extract_strided_slice %0 {offsets = [0, 0], sizes = [16, 1], strides = [1, 1]} : vector<16x4xf32> to vector<16x1xf32>
    %4 = vector.broadcast %3 : vector<16x1xf32> to vector<16x32xf32>
    %5 = vector.broadcast %1 : vector<1x32xf32> to vector<16x32xf32>
    %6 = arith.mulf %4, %5 : vector<16x32xf32>
    %7 = vector.broadcast %2 : vector<1x32xf32> to vector<16x32xf32>
    %8 = arith.addf %6, %7 : vector<16x32xf32>
    %9 = vector.extract_strided_slice %0 {offsets = [0, 1], sizes = [16, 1], strides = [1, 1]} : vector<16x4xf32> to vector<16x1xf32>
    %10 = vector.broadcast %9 : vector<16x1xf32> to vector<16x32xf32>
    %11 = vector.broadcast %1 : vector<1x32xf32> to vector<16x32xf32>
    %12 = arith.mulf %10, %11 : vector<16x32xf32>
    %13 = vector.broadcast %2 : vector<1x32xf32> to vector<16x32xf32>
    %14 = arith.addf %12, %13 : vector<16x32xf32>
    %15 = vector.extract_strided_slice %0 {offsets = [0, 2], sizes = [16, 1], strides = [1, 1]} : vector<16x4xf32> to vector<16x1xf32>
    %16 = vector.broadcast %15 : vector<16x1xf32> to vector<16x32xf32>
    %17 = vector.broadcast %1 : vector<1x32xf32> to vector<16x32xf32>
    %18 = arith.mulf %16, %17 : vector<16x32xf32>
    %19 = vector.broadcast %2 : vector<1x32xf32> to vector<16x32xf32>
    %20 = arith.addf %18, %19 : vector<16x32xf32>
    %21 = vector.extract_strided_slice %0 {offsets = [0, 3], sizes = [16, 1], strides = [1, 1]} : vector<16x4xf32> to vector<16x1xf32>
    %22 = vector.broadcast %21 : vector<16x1xf32> to vector<16x32xf32>
    %23 = vector.broadcast %1 : vector<1x32xf32> to vector<16x32xf32>
    %24 = arith.mulf %22, %23 : vector<16x32xf32>
    %25 = vector.broadcast %2 : vector<1x32xf32> to vector<16x32xf32>
    %26 = arith.addf %24, %25 : vector<16x32xf32>
    %27 = tpu.concatenate %8, %14, %20, %26 in 1 : vector<16x32xf32>, vector<16x32xf32>, vector<16x32xf32>, vector<16x32xf32> -> vector<16x128xf32>
    %28 = math.sin %27 : vector<16x128xf32>
    %c0_5 = arith.constant 0 : index
    %c0_6 = arith.constant 0 : index
    %29 = vector.load %arg4[%c0_5, %c0_6] : memref<16x128xf32, #tpu.memory_space<vmem>>, vector<16x128xf32>
    tpu.vector_store %arg4[%c0_5, %c0_6], %28 {strides = array<i32>} : memref<16x128xf32, #tpu.memory_space<vmem>>, vector<16x128xf32>,
    return
  }
  func.func @transform_0(%arg0: i32) -> (i32, i32) {
    %c0_i32 = arith.constant 0 : i32
    %c0_i32_0 = arith.constant 0 : i32
    return %arg0, %c0_i32 : i32, i32
  }
  func.func @transform_1(%arg0: i32) -> (i32, i32) {
    %c0_i32 = arith.constant 0 : i32
    %c0_i32_0 = arith.constant 0 : i32
    %c0_i32_1 = arith.constant 0 : i32
    return %c0_i32, %c0_i32_0 : i32, i32
  }
  func.func @transform_2(%arg0: i32) -> (i32, i32) {
    %c0_i32 = arith.constant 0 : i32
    %c0_i32_0 = arith.constant 0 : i32
    %c0_i32_1 = arith.constant 0 : i32
    return %c0_i32, %c0_i32_0 : i32, i32
  }
  func.func @transform_3(%arg0: i32) -> (i32, i32) {
    %c0_i32 = arith.constant 0 : i32
    %c0_i32_0 = arith.constant 0 : i32
    return %arg0, %c0_i32 : i32, i32
  }
}

</mosaic_0001>

<llo_original>
// kernel: sinusoidal_positional_embedding.1
$region0: #{sinusoidal_positional_embedding.1}
  #allocation0 [shape = 'u32[]', space=smem, size = 0x4, offset = 0x4, fixed_abs, tag = 'smem constant byte address 0x4 - core index']
  #allocation1 [shape = 'u32[144,128]{1,0:T(1,128)}', space=vmem, size = 0x12000, scoped, tag = 'internal scratch']
  %s0 = inlined_call_operand.vmem [shape: f32[32,4], index: 0, kind: input, shape index: {}]
  %s1 = inlined_call_operand.vmem [shape: f32[1,32], index: 1, kind: input, shape index: {}]
  %s2 = inlined_call_operand.vmem [shape: f32[1,32], index: 2, kind: input, shape index: {}]
  %s3 = inlined_call_operand.vmem [shape: f32[32,128], index: 3, kind: output, shape index: {}]
  %s4 = sld [smem:[#allocation0]]
  $region45: #{sinusoidal_positional_embedding.1} parent=0
    _
  %s6 = ssub.s32 1, %s4
  %s7 = scalar_select 0, %s6, %s4
  loop: start=0, step=1, limit=4
  $region2: #{sinusoidal_positional_embedding.1} parent=0 // loop_pre_header
    _
  $region3: #{sinusoidal_positional_embedding.1} parent=0 // loop_header
    %s9 = sphi 0, %s13
    %p10 = scmp.ge.s32.totalorder %s9, 4
    %s19 = sphi 0, %s21
    %s22 = sphi 0, %s19
    %s23 = sphi 0, %s22
    %s39 = sphi 0, %s23
    %s43 = sphi 0, %s43
    %s45 = sphi 0, %s43
    %s46 = sphi 0, %s45
    %s60 = sphi 0, %s46
    %s64 = sphi 0, %s64
    %s66 = sphi 0, %s64
    %s67 = sphi 0, %s66
    %s81 = sphi 0, %s67
    %s87 = sphi 0, %s89
    %s90 = sphi 0, %s87
    %s91 = sphi 0, %s90
    %s107 = sphi 0, %s91
  $region4: #{sinusoidal_positional_embedding.1} parent=0 // loop_header_branch
    %12 = sbr.rel (%p10) target = $region8
  $region5: #{sinusoidal_positional_embedding.1} parent=0 // loop_body
    %s14 = ssub.s32 %s9, 1
    %s15 = ssub.s32 %s9, 2
    %s16 = sadd.s32 %s9, 1
    %s17 = ssub.s32 %s9, %s16
    %p18 = scmp.eq.s32.totalorder %s17, 0
    %s20 = sadd.s32 %s19, 1
    %s21 = scalar_select %p18, %s19, %s20
    %p24 = pneg %p18
    %p25 = scmp.eq.s32.totalorder %s9, 1
    %p26 = por %p24, %p25
    %p27 = scmp.ne.s32.totalorder %s19, %s22
    %p28 = scmp.eq.s32.totalorder %s9, 0
    %p29 = por %p27, %p28
    %p30 = scmp.ne.s32.totalorder %s19, %s22
    %p31 = scmp.eq.s32.totalorder %s14, 1
    %p32 = por %p30, %p31
    %p33 = scmp.ne.s32.totalorder %s22, %s23
    %p34 = scmp.eq.s32.totalorder %s14, 0
    %p35 = por %p33, %p34
    %p36 = scmp.ne.s32.totalorder %s22, %s23
    %p37 = scmp.eq.s32.totalorder %s15, 1
    %p38 = por %p36, %p37
    %p40 = scmp.ne.s32.totalorder %s23, %s39
    %p41 = scmp.eq.s32.totalorder %s15, 0
    %p42 = por %p40, %p41
    %s44 = sadd.s32 %s43, 1
    %p47 = scmp.eq.s32.totalorder %s9, 1
    %p48 = scmp.ne.s32.totalorder %s43, %s45
    %p49 = scmp.eq.s32.totalorder %s9, 0
    %p50 = por %p48, %p49
    %p51 = scmp.ne.s32.totalorder %s43, %s45
    %p52 = scmp.eq.s32.totalorder %s14, 1
    %p53 = por %p51, %p52
    %p54 = scmp.ne.s32.totalorder %s45, %s46
    %p55 = scmp.eq.s32.totalorder %s14, 0
    %p56 = por %p54, %p55
    %p57 = scmp.ne.s32.totalorder %s45, %s46
    %p58 = scmp.eq.s32.totalorder %s15, 1
    %p59 = por %p57, %p58
    %p61 = scmp.ne.s32.totalorder %s46, %s60
    %p62 = scmp.eq.s32.totalorder %s15, 0
    %p63 = por %p61, %p62
    %s65 = sadd.s32 %s64, 1
    %p68 = scmp.eq.s32.totalorder %s9, 1
    %p69 = scmp.ne.s32.totalorder %s64, %s66
    %p70 = scmp.eq.s32.totalorder %s9, 0
    %p71 = por %p69, %p70
    %p72 = scmp.ne.s32.totalorder %s64, %s66
    %p73 = scmp.eq.s32.totalorder %s14, 1
    %p74 = por %p72, %p73
    %p75 = scmp.ne.s32.totalorder %s66, %s67
    %p76 = scmp.eq.s32.totalorder %s14, 0
    %p77 = por %p75, %p76
    %p78 = scmp.ne.s32.totalorder %s66, %s67
    %p79 = scmp.eq.s32.totalorder %s15, 1
    %p80 = por %p78, %p79
    %p82 = scmp.ne.s32.totalorder %s67, %s81
    %p83 = scmp.eq.s32.totalorder %s15, 0
    %p84 = por %p82, %p83
    %s85 = ssub.s32 %s9, %s16
    %p86 = scmp.eq.s32.totalorder %s85, 0
    %s88 = sadd.s32 %s87, 1
    %s89 = scalar_select %p86, %s87, %s88
    %p92 = pneg %p86
    %p93 = scmp.eq.s32.totalorder %s9, 1
    %p94 = por %p92, %p93
    %p95 = scmp.ne.s32.totalorder %s87, %s90
    %p96 = scmp.eq.s32.totalorder %s9, 0
    %p97 = por %p95, %p96
    %p98 = scmp.ne.s32.totalorder %s87, %s90
    %p99 = scmp.eq.s32.totalorder %s14, 1
    %p100 = por %p98, %p99
    %p101 = scmp.ne.s32.totalorder %s90, %s91
    %p102 = scmp.eq.s32.totalorder %s14, 0
    %p103 = por %p101, %p102
    %p104 = scmp.ne.s32.totalorder %s90, %s91
    %p105 = scmp.eq.s32.totalorder %s15, 1
    %p106 = por %p104, %p105
    %p108 = scmp.ne.s32.totalorder %s91, %s107
    %p109 = scmp.eq.s32.totalorder %s15, 0
    %p110 = por %p108, %p109
    %p111 = scmp.le.s32.totalorder 1, %s9
    %p112 = scmp.lt.s32.totalorder %s9, 3
    %p113 = pnand %p111, %p112
    %p114 = pneg %p113
    // Predicated region
    $region9: #{sinusoidal_positional_embedding.1} parent=5 // pred_check
      _
    $region10: #{sinusoidal_positional_embedding.1} parent=5 // pred_check_branch
      %116 = sbr.rel (%p113) target = $region12
    $region11: #{sinusoidal_positional_embedding.1} parent=5 // pred_region
      %s117 = ssub.s32 %s9, 1
      // Predicated region
      $region13: #{sinusoidal_positional_embedding.1} parent=11 // pred_check
        %p118 = pneg %p56
      $region14: #{sinusoidal_positional_embedding.1} parent=11 // pred_check_branch
        %120 = sbr.rel (%p118) target = $region16
      $region15: #{sinusoidal_positional_embedding.1} parent=11 // pred_region
        _
      $region16: #{sinusoidal_positional_embedding.1} parent=11 // pred_fallthru
        _
      // Predicated region
      $region17: #{sinusoidal_positional_embedding.1} parent=11 // pred_check
        %p121 = pneg %p77
      $region18: #{sinusoidal_positional_embedding.1} parent=11 // pred_check_branch
        %123 = sbr.rel (%p121) target = $region20
      $region19: #{sinusoidal_positional_embedding.1} parent=11 // pred_region
        _
      $region20: #{sinusoidal_positional_embedding.1} parent=11 // pred_fallthru
        _
    $region12: #{sinusoidal_positional_embedding.1} parent=5 // pred_fallthru
      _
    %p124 = scmp.lt.s32.totalorder %s9, 2
    // Predicated region
    $region21: #{sinusoidal_positional_embedding.1} parent=5 // pred_check
      %p125 = pneg %p124
    $region22: #{sinusoidal_positional_embedding.1} parent=5 // pred_check_branch
      %127 = sbr.rel (%p125) target = $region24
    $region23: #{sinusoidal_positional_embedding.1} parent=5 // pred_region
      // Predicated region
      $region25: #{sinusoidal_positional_embedding.1} parent=23 // pred_check
        %p128 = pneg %p29
      $region26: #{sinusoidal_positional_embedding.1} parent=23 // pred_check_branch
        %130 = sbr.rel (%p128) target = $region28
      $region27: #{sinusoidal_positional_embedding.1} parent=23 // pred_region
        %s131 = smul.u32 2, %s9
        %p132 = scmp.lt.s32.totalorder %s131, 3
        %s133 = scalar_select %p132, %s131, 3
        %s134 = smul.addr %s133, 8
        %s135 = scalar_lea.vmem %s0, %s134
        %s136 = smul.u32 2, %s9
      $region28: #{sinusoidal_positional_embedding.1} parent=23 // pred_fallthru
        _
    $region24: #{sinusoidal_positional_embedding.1} parent=5 // pred_fallthru
      _
    %p137 = scmp.le.s32.totalorder 1, %s9
    %p138 = scmp.lt.s32.totalorder %s9, 3
    %p139 = pnand %p137, %p138
    %p140 = pneg %p139
    // Predicated region
    $region29: #{sinusoidal_positional_embedding.1} parent=5 // pred_check
      _
    $region30: #{sinusoidal_positional_embedding.1} parent=5 // pred_check_branch
      %142 = sbr.rel (%p139) target = $region32
    $region31: #{sinusoidal_positional_embedding.1} parent=5 // pred_region
      %s143 = ssub.s32 %s9, 1
      %s144 = smul.u32 2, %s14
      %p145 = scmp.lt.s32.totalorder %s144, 3
      %s146 = scalar_select %p145, %s144, 3
      %s147 = smul.addr %s146, 8
      %s148 = scalar_lea.vmem %s0, %s147
      %p149 = pneg %p35
      %p150 = pneg %p32
      %p151 = pneg %p56
      %p152 = pneg %p53
      %p153 = pneg %p77
      %p154 = pneg %p74
      %p155 = pneg %p103
      %p156 = pneg %p100
      %s157 = smul.u32 2, %s14
      %p158 = scmp.lt.s32.totalorder %s157, 3
      %s159 = scalar_select %p158, %s157, 3
      %s160 = smul.addr %s159, 8
      %s161 = scalar_lea.vmem %s3, %s160
      %s162 = smul.u32 2, %s14
      %p163 = scmp.lt.s32.totalorder %s162, 3
      %s164 = scalar_select %p163, %s162, 3
      %s165 = smul.addr %s164, 8
      %s166 = scalar_lea.vmem %s0, %s165
      %s167 = smul.u32 2, %s14
      %s168 = smul.u32 2, %s14
      %p169 = scmp.lt.s32.totalorder %s168, 3
      %s170 = scalar_select %p169, %s168, 3
      %s171 = smul.addr %s170, 8
      %s172 = scalar_lea.vmem %s3, %s171
      %s173 = smul.u32 2, %s14
      %v174 = vld [vmem:[%s166] sm:$0xff]
      %v175 = vld [vmem:[%s166 + $0x8] sm:$0xff]
      %v176 = vld [vmem:[%s1] sm:$0x1]
      %v177 = vld [vmem:[%s2] sm:$0x1]
      %179 = vset.pattern.permute.xlu0 0
      %180 = vperm.xlu0 %179, %v174
      %v181 = vpop.permute.xlu0 %180
      %184 = vset.pattern.permute.xlu0 0
      %185 = vperm.xlu0 %184, %v175
      %v186 = vpop.permute.xlu0 %185
      %v189 = vlaneseq
      %v190 = vshrl.u32 %v189, 7
      %v191 = vsub.s32 0, %v190
      %v192 = vrot.slane %v176, %v191
      %v194 = vmul.f32 %v181, %v192
      %v195 = vmul.f32 %v186, %v192
      %v197 = vlaneseq
      %v198 = vshrl.u32 %v197, 7
      %v199 = vsub.s32 0, %v198
      %v200 = vrot.slane %v177, %v199
      %v202 = vadd.f32 %v194, %v200
      %v203 = vadd.f32 %v195, %v200
      %204 = vset.pattern.permute.xlu0 1
      %205 = vperm.xlu0 %204, %v174
      %v206 = vpop.permute.xlu0 %205
      %208 = vset.pattern.permute.xlu0 1
      %209 = vperm.xlu0 %208, %v175
      %v210 = vpop.permute.xlu0 %209
      %v212 = vmul.f32 %v206, %v192
      %v213 = vmul.f32 %v210, %v192
      %v214 = vadd.f32 %v212, %v200
      %v215 = vadd.f32 %v213, %v200
      %216 = vset.pattern.permute.xlu0 2
      %217 = vperm.xlu0 %216, %v174
      %v218 = vpop.permute.xlu0 %217
      %220 = vset.pattern.permute.xlu0 2
      %221 = vperm.xlu0 %220, %v175
      %v222 = vpop.permute.xlu0 %221
      %v224 = vmul.f32 %v218, %v192
      %v225 = vmul.f32 %v222, %v192
      %v226 = vadd.f32 %v224, %v200
      %v227 = vadd.f32 %v225, %v200
      %228 = vset.pattern.permute.xlu0 3
      %229 = vperm.xlu0 %228, %v174
      %v230 = vpop.permute.xlu0 %229
      %232 = vset.pattern.permute.xlu0 3
      %233 = vperm.xlu0 %232, %v175
      %v234 = vpop.permute.xlu0 %233
      %v236 = vmul.f32 %v230, %v192
      %v237 = vmul.f32 %v234, %v192
      %v238 = vadd.f32 %v236, %v200
      %v239 = vadd.f32 %v237, %v200
      %242 = vrot.lane.b32.xlu0 %v214, 32
      %v243 = vpop.permute.xlu0 %242
      %244 = vrot.lane.b32.xlu0 %v215, 32
      %v245 = vpop.permute.xlu0 %244
      %250 = vrot.lane.b32.xlu0 %v226, 64
      %v251 = vpop.permute.xlu0 %250
      %252 = vrot.lane.b32.xlu0 %v227, 64
      %v253 = vpop.permute.xlu0 %252
      %258 = vrot.lane.b32.xlu0 %v238, 96
      %v259 = vpop.permute.xlu0 %258
      %260 = vrot.lane.b32.xlu0 %v239, 96
      %v261 = vpop.permute.xlu0 %260
      %vm264 = vcmask 261120
      %v265 = vsel %vm264, %v202, %v243
      %v266 = vsel %vm264, %v203, %v245
      %vm267 = vcmask 523264
      %v268 = vsel %vm267, %v265, %v251
      %v269 = vsel %vm267, %v266, %v253
      %vm270 = vcmask 785408
      %v271 = vsel %vm270, %v268, %v259
      %v272 = vsel %vm270, %v269, %v261
      %v273 = vand.u32 2147483647, %v271
      %vm274 = vcmp.le.f32.partialorder %v273, 0.7853982
      %vm275 = vcmp.lt.s32.totalorder %v271, 0
      %v276 = vand.u32 %v271, 2139095040
      %v277 = vshrl.u32 %v276, 23
      %v278 = vsub.s32 %v277, 127
      %v279 = vand.u32 2147483647, %v271
      %v280 = vand.u32 %v279, 8388607
      %v281 = vor.u32 %v280, 8388608
      %v282 = vsub.s32 0, %v281
      %v283 = vadd.s32 %v278, 1
      %vm284 = vcmp.gt.s32.totalorder %v283, 0
      %v285 = vsel %vm284, %v283, 0
      %v286 = vshrl.u32 %v285, 5
      %v287 = vand.u32 %v285, 31
      %v288 = vsub.s32 32, %v287
      %v289 = vshrl.u32 683565275, %v288
      %v290 = vshll.u32 683565275, %v287
      %v291 = vshrl.u32 2475754826, %v288
      %v292 = vor.u32 %v290, %v291
      %v293 = vshll.u32 2475754826, %v287
      %v294 = vshrl.u32 2131351028, %v288
      %v295 = vor.u32 %v293, %v294
      %v296 = vshll.u32 2131351028, %v287
      %v297 = vshrl.u32 2102212464, %v288
      %v298 = vor.u32 %v296, %v297
      %v299 = vshll.u32 2102212464, %v287
      %v300 = vshrl.u32 920167782, %v288
      %v301 = vor.u32 %v299, %v300
      %v302 = vshll.u32 920167782, %v287
      %v303 = vshrl.u32 1326507024, %v288
      %v304 = vor.u32 %v302, %v303
      %vm305 = vcmp.lt.s32.totalorder %v286, 1
      %vm306 = vcmp.lt.s32.totalorder %v286, 2
      %vm307 = vcmp.lt.s32.totalorder %v286, 3
      %vm308 = vcmp.lt.s32.totalorder %v286, 4
      %v309 = vsel %vm305, %v289, %v292
      %v310 = vsel %vm308, %v298, 2102212464
      %v311 = vsel %vm307, %v295, %v310
      %v312 = vsel %vm306, %v309, %v311
      %v313 = vsel %vm305, %v292, %v295
      %v314 = vsel %vm308, %v301, 920167782
      %v315 = vsel %vm307, %v298, %v314
      %v316 = vsel %vm306, %v313, %v315
      %v317 = vsel %vm305, %v295, %v298
      %v318 = vsel %vm308, %v304, 1326507024
      %v319 = vsel %vm307, %v301, %v318
      %v320 = vsel %vm306, %v317, %v319
      %v321 = vshll.u32 %v281, 8
      %v322 = vmul.u32.u64.compose %v321, %v320
      %v323 = vextract.low.u32 %v322
      %v324 = vextract.high.u32 %v322
      %v325 = vmul.u32.u64.compose %v321, %v316
      %v326 = vextract.low.u32 %v325
      %v327 = vextract.high.u32 %v325
      %v328 = vmul.u32 %v321, %v312
      %v329 = vadd.s32 %v324, %v326
      %vm330 = vc.u32 %v324, %v326
      %v331 = vadd.s32 %v327, 1
      %v332 = vsel %vm330, %v331, %v327
      %v333 = vadd.s32 %v328, %v332
      %v334 = vadd.s32 %v333, 536870912
      %v335 = vshrl.u32 %v334, 30
      %v336 = vshll.u32 %v335, 30
      %v337 = vsub.s32 %v333, %v336
      %vm338 = vcmp.lt.s32.totalorder %v337, 0
      %v339 = vsub.s32 0, %v337
      %v340 = vsel %vm338, %v339, %v337
      %v341 = vclz %v340
      %v342 = vsub.s32 %v341, 2
      %vm343 = vcmp.gt.s32.totalorder 0, %v342
      %v344 = vsel %vm343, 0, %v342
      %v345 = vsub.s32 32, %v344
      %v346 = vshll.u32 %v337, %v344
      %v347 = vshrl.u32 %v329, %v345
      %v348 = vor.u32 %v346, %v347
      %v349 = vsub.s32 4294967266, %v344
      %v350 = vadd.s32 %v349, 127
      %v351 = vshll.u32 %v350, 23
      %v352 = vor.u32 4788187, %v351
      %v353 = vand.u32 2147483647, %v352
      %v355 = vcvt.s32.f32 %v348
      %v356 = vmul.f32 %v355, %v353
      %v357 = vxor.u32 %v356, 2147483648
      %v358 = vsel %vm275, %v357, %v356
      %v359 = vsub.s32 4, %v335
      %v360 = vsel %vm275, %v359, %v335
      %v361 = vsel %vm274, %v271, %v358
      %v362 = vsel %vm274, 0, %v360
      %v363 = vcosq.f32.pop %v361
      %v364 = vsinq.f32.pop %v361
      %vm365 = vweird.f32 %v271
      %v366 = vadd.s32 %v362, 3
      %v367 = vand.u32 %v366, 3
      %vm368 = vcmp.lt.s32.totalorder %v367, 2
      %vm369 = vcmp.eq.s32.totalorder %v367, 0
      %v370 = vxor.u32 %v364, 2147483648
      %v371 = vsel %vm369, %v363, %v370
      %vm372 = vcmp.eq.s32.totalorder %v367, 2
      %v373 = vxor.u32 %v363, 2147483648
      %v374 = vsel %vm372, %v373, %v364
      %v375 = vsel %vm368, %v371, %v374
      %v376 = vsel %vm365, nan, %v375
      %v377 = vand.u32 2147483647, %v272
      %vm378 = vcmp.le.f32.partialorder %v377, 0.7853982
      %vm379 = vcmp.lt.s32.totalorder %v272, 0
      %v380 = vand.u32 %v272, 2139095040
      %v381 = vshrl.u32 %v380, 23
      %v382 = vsub.s32 %v381, 127
      %v383 = vand.u32 2147483647, %v272
      %v384 = vand.u32 %v383, 8388607
      %v385 = vor.u32 %v384, 8388608
      %v386 = vsub.s32 0, %v385
      %v387 = vadd.s32 %v382, 1
      %vm388 = vcmp.gt.s32.totalorder %v387, 0
      %v389 = vsel %vm388, %v387, 0
      %v390 = vshrl.u32 %v389, 5
      %v391 = vand.u32 %v389, 31
      %v392 = vsub.s32 32, %v391
      %v393 = vshrl.u32 683565275, %v392
      %v394 = vshll.u32 683565275, %v391
      %v395 = vshrl.u32 2475754826, %v392
      %v396 = vor.u32 %v394, %v395
      %v397 = vshll.u32 2475754826, %v391
      %v398 = vshrl.u32 2131351028, %v392
      %v399 = vor.u32 %v397, %v398
      %v400 = vshll.u32 2131351028, %v391
      %v401 = vshrl.u32 2102212464, %v392
      %v402 = vor.u32 %v400, %v401
      %v403 = vshll.u32 2102212464, %v391
      %v404 = vshrl.u32 920167782, %v392
      %v405 = vor.u32 %v403, %v404
      %v406 = vshll.u32 920167782, %v391
      %v407 = vshrl.u32 1326507024, %v392
      %v408 = vor.u32 %v406, %v407
      %vm409 = vcmp.lt.s32.totalorder %v390, 1
      %vm410 = vcmp.lt.s32.totalorder %v390, 2
      %vm411 = vcmp.lt.s32.totalorder %v390, 3
      %vm412 = vcmp.lt.s32.totalorder %v390, 4
      %v413 = vsel %vm409, %v393, %v396
      %v414 = vsel %vm412, %v402, 2102212464
      %v415 = vsel %vm411, %v399, %v414
      %v416 = vsel %vm410, %v413, %v415
      %v417 = vsel %vm409, %v396, %v399
      %v418 = vsel %vm412, %v405, 920167782
      %v419 = vsel %vm411, %v402, %v418
      %v420 = vsel %vm410, %v417, %v419
      %v421 = vsel %vm409, %v399, %v402
      %v422 = vsel %vm412, %v408, 1326507024
      %v423 = vsel %vm411, %v405, %v422
      %v424 = vsel %vm410, %v421, %v423
      %v425 = vshll.u32 %v385, 8
      %v426 = vmul.u32.u64.compose %v425, %v424
      %v427 = vextract.low.u32 %v426
      %v428 = vextract.high.u32 %v426
      %v429 = vmul.u32.u64.compose %v425, %v420
      %v430 = vextract.low.u32 %v429
      %v431 = vextract.high.u32 %v429
      %v432 = vmul.u32 %v425, %v416
      %v433 = vadd.s32 %v428, %v430
      %vm434 = vc.u32 %v428, %v430
      %v435 = vadd.s32 %v431, 1
      %v436 = vsel %vm434, %v435, %v431
      %v437 = vadd.s32 %v432, %v436
      %v438 = vadd.s32 %v437, 536870912
      %v439 = vshrl.u32 %v438, 30
      %v440 = vshll.u32 %v439, 30
      %v441 = vsub.s32 %v437, %v440
      %vm442 = vcmp.lt.s32.totalorder %v441, 0
      %v443 = vsub.s32 0, %v441
      %v444 = vsel %vm442, %v443, %v441
      %v445 = vclz %v444
      %v446 = vsub.s32 %v445, 2
      %vm447 = vcmp.gt.s32.totalorder 0, %v446
      %v448 = vsel %vm447, 0, %v446
      %v449 = vsub.s32 32, %v448
      %v450 = vshll.u32 %v441, %v448
      %v451 = vshrl.u32 %v433, %v449
      %v452 = vor.u32 %v450, %v451
      %v453 = vsub.s32 4294967266, %v448
      %v454 = vadd.s32 %v453, 127
      %v455 = vshll.u32 %v454, 23
      %v456 = vor.u32 4788187, %v455
      %v457 = vand.u32 2147483647, %v456
      %v459 = vcvt.s32.f32 %v452
      %v460 = vmul.f32 %v459, %v457
      %v461 = vxor.u32 %v460, 2147483648
      %v462 = vsel %vm379, %v461, %v460
      %v463 = vsub.s32 4, %v439
      %v464 = vsel %vm379, %v463, %v439
      %v465 = vsel %vm378, %v272, %v462
      %v466 = vsel %vm378, 0, %v464
      %v467 = vcosq.f32.pop %v465
      %v468 = vsinq.f32.pop %v465
      %vm469 = vweird.f32 %v272
      %v470 = vadd.s32 %v466, 3
      %v471 = vand.u32 %v470, 3
      %vm472 = vcmp.lt.s32.totalorder %v471, 2
      %vm473 = vcmp.eq.s32.totalorder %v471, 0
      %v474 = vxor.u32 %v468, 2147483648
      %v475 = vsel %vm473, %v467, %v474
      %vm476 = vcmp.eq.s32.totalorder %v471, 2
      %v477 = vxor.u32 %v467, 2147483648
      %v478 = vsel %vm476, %v477, %v468
      %v479 = vsel %vm472, %v475, %v478
      %v480 = vsel %vm469, nan, %v479
      %481 = vst [vmem:[%s172] sm:$0xff] %v376
      %482 = vst [vmem:[%s172 + $0x8] sm:$0xff] %v480
      %s483 = smul.u32 2, %s14
      %p484 = scmp.lt.s32.totalorder %s483, 3
      %s485 = scalar_select %p484, %s483, 3
      %s486 = smul.addr %s485, 8
      %s487 = scalar_lea.vmem %s3, %s486
      // Predicated region
      $region33: #{sinusoidal_positional_embedding.1} parent=31 // pred_check
        %p488 = pneg %p100
      $region34: #{sinusoidal_positional_embedding.1} parent=31 // pred_check_branch
        %490 = sbr.rel (%p488) target = $region36
      $region35: #{sinusoidal_positional_embedding.1} parent=31 // pred_region
        %s491 = smul.u32 2, %s14
      $region36: #{sinusoidal_positional_embedding.1} parent=31 // pred_fallthru
        _
    $region32: #{sinusoidal_positional_embedding.1} parent=5 // pred_fallthru
      _
    %p492 = scmp.le.s32.totalorder 2, %s9
    // Predicated region
    $region37: #{sinusoidal_positional_embedding.1} parent=5 // pred_check
      %p493 = pneg %p492
    $region38: #{sinusoidal_positional_embedding.1} parent=5 // pred_check_branch
      %495 = sbr.rel (%p493) target = $region40
    $region39: #{sinusoidal_positional_embedding.1} parent=5 // pred_region
      %s496 = ssub.s32 %s9, 2
      // Predicated region
      $region41: #{sinusoidal_positional_embedding.1} parent=39 // pred_check
        %p497 = pneg %p106
      $region42: #{sinusoidal_positional_embedding.1} parent=39 // pred_check_branch
        %499 = sbr.rel (%p497) target = $region44
      $region43: #{sinusoidal_positional_embedding.1} parent=39 // pred_region
        %s500 = smul.u32 2, %s15
        %p501 = scmp.lt.s32.totalorder %s500, 3
        %s502 = scalar_select %p501, %s500, 3
        %s503 = smul.addr %s502, 8
        %s504 = scalar_lea.vmem %s3, %s503
      $region44: #{sinusoidal_positional_embedding.1} parent=39 // pred_fallthru
        _
    $region40: #{sinusoidal_positional_embedding.1} parent=5 // pred_fallthru
      _
  $region6: #{sinusoidal_positional_embedding.1} parent=0 // loop_footer
    %s13 = sadd.s32 1, %s9
  $region7: #{sinusoidal_positional_embedding.1} parent=0 // loop_footer_branch
    %8 = sbr.rel target = $region3
  $region8: #{sinusoidal_positional_embedding.1} parent=0 // loop_exit
    _

</llo_original>
